<compile_context>
chip_gen: v6e
topology: v6e:2x2x1
jax: 0.10.0
libtpu: 0.0.40
codegen_flags: <defaults>
</compile_context>

<pallas_src>
import jax
import jax.numpy as jnp
from jax.experimental import pallas as pl
from jax.experimental.pallas import tpu as pltpu


def _pick_row_tile(H, W):
    """Smallest row-tile TH dividing H with TH*W a multiple of 128 (lane-dense)."""
    for th in range(1, H):
        if H % th == 0 and (th * W) % 128 == 0:
            return th
    return H


def _make_conv_kernel(W, TH, Cin, Cout, n_row_tiles):
    """3x3 same-conv + bias + ReLU for one (sample, row-tile) in (Cout, M) layout."""
    M = TH * W              # output lanes per step (multiple of 128 when tiled)
    WIN = (TH + 2) * W      # input lanes needed per step (TH output rows + 2 halo rows)

    def kernel(x_ref, w_ref, b_ref, o_ref):
        # x_ref : (3*Cin, Hp*W) f32  dx-shifted slabs of ONE padded sample
        #         row dx*Cin+ci, lane yp*W+x  ==  xpad[ci, yp, x+dx]
        # w_ref : (3, Cout, 3*Cin)   f32  w_ref[dy, co, dx*Cin+ci] = w[co,ci,dy,dx]
        # b_ref : (Cout, 1)          f32
        # o_ref : (Cout, M)          f32  output rows [j*TH, (j+1)*TH) of this sample
        if n_row_tiles == 1:
            base = 0
        else:
            # j * TH*W is a multiple of 128 by construction of TH.
            base = pl.multiple_of(pl.program_id(1) * M, 128)

        # One lane-aligned dynamic window; the 3 dy taps are static lane shifts.
        win = x_ref[:, pl.ds(base, WIN)]                      # (3*Cin, WIN)

        acc = jnp.dot(w_ref[0], win[:, 0 * W:0 * W + M],
                      preferred_element_type=jnp.float32)
        acc = acc + jnp.dot(w_ref[1], win[:, 1 * W:1 * W + M],
                            preferred_element_type=jnp.float32)
        acc = acc + jnp.dot(w_ref[2], win[:, 2 * W:2 * W + M],
                            preferred_element_type=jnp.float32)

        o_ref[...] = jnp.maximum(acc + b_ref[...], 0.0).astype(o_ref.dtype)

    return kernel


def conv3x3_relu_pallas(x_nchw, w3, b2, cout):
    """Fused 3x3 same-padding conv + bias + ReLU.

    x_nchw: (N, Cin, H, W) f32
    w3:     (3, Cout, 3*Cin) f32   w3[dy, co, dx*Cin+ci] = weight[co, ci, dy, dx]
    b2:     (Cout, 1) f32
    returns (N, Cout, H*W) f32  (lane-dense; flatten to (N, Cout*H*W) is a reshape)
    """
    N, Cin, H, W = x_nchw.shape
    Hp = H + 2
    L = Hp * W

    # Tiny-input prep only: zero-pad spatial, build 3 dx-shifted stride-W slabs.
    xpad = jnp.pad(x_nchw, ((0, 0), (0, 0), (1, 1), (1, 1)))          # (N,Cin,Hp,Wp)
    slab = jnp.stack([xpad[:, :, :, dx:dx + W] for dx in range(3)],
                     axis=1)                                          # (N,3,Cin,Hp,W)
    slab = slab.reshape(N, 3 * Cin, L)                                # (N,3*Cin,Hp*W)

    TH = _pick_row_tile(H, W)
    n_tiles = H // TH
    M = TH * W
    kernel = _make_conv_kernel(W, TH, Cin, cout, n_tiles)

    flops = 2 * N * H * W * 9 * Cin * cout
    bytes_accessed = (slab.size * 4 + w3.size * 4 + b2.size * 4
                      + N * cout * H * W * 4)

    out = pl.pallas_call(
        kernel,
        out_shape=jax.ShapeDtypeStruct((N, cout, H * W), jnp.float32),
        grid=(N, n_tiles),
        in_specs=[
            pl.BlockSpec((None, 3 * Cin, L), lambda i, j: (i, 0, 0)),
            pl.BlockSpec((3, cout, 3 * Cin), lambda i, j: (0, 0, 0)),
            pl.BlockSpec((cout, 1), lambda i, j: (0, 0)),
        ],
        out_specs=pl.BlockSpec((None, cout, M), lambda i, j: (i, 0, j)),
        compiler_params=pltpu.CompilerParams(
            dimension_semantics=("parallel", "parallel"),
            vmem_limit_bytes=32 * 1024 * 1024,
        ),
        cost_estimate=pl.CostEstimate(
            flops=flops, transcendentals=0, bytes_accessed=bytes_accessed),
    )(slab, w3, b2)
    return out


class SlowFastPallas:
    """SlowFast wrapper: two conv pathways fused into one Pallas conv kernel."""

    def __init__(self, in_channels, slow_channels=16, fast_channels=4,
                 key=None):
        if key is None:
            key = jax.random.PRNGKey(42)
        k_ws, k_bs, k_wf, k_bf = jax.random.split(key, 4)
        scale = 0.1
        w_slow = scale * jax.random.normal(
            k_ws, (slow_channels, in_channels, 3, 3), jnp.float32)
        b_slow = scale * jax.random.normal(k_bs, (slow_channels,), jnp.float32)
        w_fast = scale * jax.random.normal(
            k_wf, (fast_channels, in_channels, 3, 3), jnp.float32)
        b_fast = scale * jax.random.normal(k_bf, (fast_channels,), jnp.float32)

        # Both pathways share the same taps -> concatenate along Cout and
        # pre-layout the weights ONCE (hoisted out of __call__).
        self.w_conv = jnp.concatenate([w_slow, w_fast], axis=0)   # (Cout,Cin,3,3)
        self.b_conv = jnp.concatenate([b_slow, b_fast], axis=0)   # (Cout,)
        self.cout = int(self.w_conv.shape[0])
        cin = int(self.w_conv.shape[1])
        # (Cout,Cin,dy,dx) -> (dy,Cout,dx,Cin) -> (3, Cout, 3*Cin): per-dy
        # weight matrices matching the dx-shifted slab row order dx*Cin+ci.
        self.w3 = jnp.transpose(self.w_conv, (2, 0, 3, 1)).reshape(
            3, self.cout, 3 * cin).astype(jnp.float32)
        self.b2 = self.b_conv.reshape(self.cout, 1).astype(jnp.float32)

    def __call__(self, x):
        """x: (Nvideos, Channels, W, H) -> features: (B, C*W*H)"""
        feat = conv3x3_relu_pallas(x, self.w3, self.b2, self.cout)  # (N,Cout,H*W)
        return feat.reshape(feat.shape[0], -1)                      # pure reshape


if __name__ == "__main__":
    N, C, H, W = 2, 4, 16, 16
    key = jax.random.PRNGKey(0)
    k_x, k_params = jax.random.split(key)
    x = jax.random.normal(k_x, (N, C, H, W), jnp.float32)

    model = SlowFastPallas(in_channels=C, slow_channels=16, fast_channels=4,
                           key=k_params)
    fwd = jax.jit(lambda inp: model(inp))
    out = fwd(x)
    jax.block_until_ready(out)

    expected = (N, (16 + 4) * H * W)
    assert out.shape == expected, (out.shape, expected)
    assert bool(jnp.all(jnp.isfinite(out)))

    # Numerical check against an XLA reference of the stand-in backbone.
    ref = jax.lax.conv_general_dilated(
        x, model.w_conv, (1, 1), "SAME",
        dimension_numbers=("NCHW", "OIHW", "NCHW"),
        precision=jax.lax.Precision.HIGHEST)
    ref = jnp.maximum(ref + model.b_conv.reshape(1, -1, 1, 1), 0.0)
    ref = ref.reshape(N, -1)
    assert bool(jnp.allclose(out, ref, atol=1e-2, rtol=1e-2)), "mismatch vs reference"

    print("KERNEL_OK")
</pallas_src>

<mosaic_0001>
module attributes {stable_mosaic.version = 11 : i64} {
  func.func @kernel(%arg0: i32, %arg1: i32, %arg2: memref<1x12x288xf32, #tpu.memory_space<vmem>>, %arg3: memref<3x20x12xf32, #tpu.memory_space<vmem>>, %arg4: memref<20x1xf32, #tpu.memory_space<vmem>>, %arg5: memref<1x20x128xf32, #tpu.memory_space<vmem>>) attributes {dimension_semantics = [#tpu.dimension_semantics<parallel>, #tpu.dimension_semantics<parallel>], iteration_bounds = array<i64: 2, 2>, scalar_prefetch = 0 : i64, scratch_operands = 0 : i64, tpu.core_type = #tpu.core_type<tc>, window_params = [{transform_indices = @transform_0, window_bounds = array<i64: 1, 12, 288>}, {pipeline_mode = #tpu.pipeline_mode<synchronous>, transform_indices = @transform_1, window_bounds = array<i64: 3, 20, 12>}, {pipeline_mode = #tpu.pipeline_mode<synchronous>, transform_indices = @transform_2, window_bounds = array<i64: 20, 1>}, {transform_indices = @transform_3, window_bounds = array<i64: 1, 20, 128>}]} {
    %c128_i32 = arith.constant 128 : i32
    %0 = arith.muli %arg1, %c128_i32 : i32
    %1 = tpu.assume_multiple %0, 128 : i32
    %c0 = arith.constant 0 : index
    %c0_0 = arith.constant 0 : index
    %2 = arith.index_cast %1 : i32 to index
    %3 = vector.load %arg2[%c0, %c0_0, %2] : memref<1x12x288xf32, #tpu.memory_space<vmem>>, vector<1x12x160xf32>
    %4 = vector.shape_cast %3 : vector<1x12x160xf32> to vector<12x160xf32>
    %c0_1 = arith.constant 0 : index
    %c0_2 = arith.constant 0 : index
    %c0_3 = arith.constant 0 : index
    %5 = vector.load %arg3[%c0_1, %c0_2, %c0_3] : memref<3x20x12xf32, #tpu.memory_space<vmem>>, vector<1x20x12xf32>
    %6 = vector.shape_cast %5 : vector<1x20x12xf32> to vector<20x12xf32>
    %7 = vector.extract_strided_slice %4 {offsets = [0, 0], sizes = [12, 128], strides = [1, 1]} : vector<12x160xf32> to vector<12x128xf32>
    %cst = arith.constant dense<0.000000e+00> : vector<20x128xf32>
    %8 = tpu.matmul %6, %7, %cst {dimension_numbers = #tpu.dot_dimension_numbers<[1], [0], [0], [1], [0, 0, 1, 1], [], []>} : vector<20x12xf32>, vector<12x128xf32>, vector<20x128xf32> -> vector<20x128xf32>
    %c1 = arith.constant 1 : index
    %c0_4 = arith.constant 0 : index
    %c0_5 = arith.constant 0 : index
    %9 = vector.load %arg3[%c1, %c0_4, %c0_5] : memref<3x20x12xf32, #tpu.memory_space<vmem>>, vector<1x20x12xf32>
    %10 = vector.shape_cast %9 : vector<1x20x12xf32> to vector<20x12xf32>
    %11 = vector.extract_strided_slice %4 {offsets = [0, 16], sizes = [12, 128], strides = [1, 1]} : vector<12x160xf32> to vector<12x128xf32>
    %cst_6 = arith.constant dense<0.000000e+00> : vector<20x128xf32>
    %12 = tpu.matmul %10, %11, %cst_6 {dimension_numbers = #tpu.dot_dimension_numbers<[1], [0], [0], [1], [0, 0, 1, 1], [], []>} : vector<20x12xf32>, vector<12x128xf32>, vector<20x128xf32> -> vector<20x128xf32>
    %13 = arith.addf %8, %12 : vector<20x128xf32>
    %c2 = arith.constant 2 : index
    %c0_7 = arith.constant 0 : index
    %c0_8 = arith.constant 0 : index
    %14 = vector.load %arg3[%c2, %c0_7, %c0_8] : memref<3x20x12xf32, #tpu.memory_space<vmem>>, vector<1x20x12xf32>
    %15 = vector.shape_cast %14 : vector<1x20x12xf32> to vector<20x12xf32>
    %16 = vector.extract_strided_slice %4 {offsets = [0, 32], sizes = [12, 128], strides = [1, 1]} : vector<12x160xf32> to vector<12x128xf32>
    %cst_9 = arith.constant dense<0.000000e+00> : vector<20x128xf32>
    %17 = tpu.matmul %15, %16, %cst_9 {dimension_numbers = #tpu.dot_dimension_numbers<[1], [0], [0], [1], [0, 0, 1, 1], [], []>} : vector<20x12xf32>, vector<12x128xf32>, vector<20x128xf32> -> vector<20x128xf32>
    %18 = arith.addf %13, %17 : vector<20x128xf32>
    %c0_10 = arith.constant 0 : index
    %c0_11 = arith.constant 0 : index
    %19 = vector.load %arg4[%c0_10, %c0_11] : memref<20x1xf32, #tpu.memory_space<vmem>>, vector<20x1xf32>
    %20 = vector.broadcast %19 : vector<20x1xf32> to vector<20x128xf32>
    %21 = arith.addf %18, %20 : vector<20x128xf32>
    %cst_12 = arith.constant 0.000000e+00 : f32
    %22 = vector.broadcast %cst_12 : f32 to vector<20x128xf32>
    %23 = arith.maximumf %21, %22 : vector<20x128xf32>
    %c0_13 = arith.constant 0 : index
    %c0_14 = arith.constant 0 : index
    %c0_15 = arith.constant 0 : index
    %24 = vector.load %arg5[%c0_13, %c0_14, %c0_15] : memref<1x20x128xf32, #tpu.memory_space<vmem>>, vector<1x20x128xf32>
    %25 = vector.shape_cast %24 : vector<1x20x128xf32> to vector<20x128xf32>
    %26 = vector.shape_cast %23 : vector<20x128xf32> to vector<1x20x128xf32>
    tpu.vector_store %arg5[%c0_13, %c0_14, %c0_15], %26 {strides = array<i32>} : memref<1x20x128xf32, #tpu.memory_space<vmem>>, vector<1x20x128xf32>,
    return
  }
  func.func @transform_0(%arg0: i32, %arg1: i32) -> (i32, i32, i32) {
    %c0_i32 = arith.constant 0 : i32
    %c0_i32_0 = arith.constant 0 : i32
    %c0_i32_1 = arith.constant 0 : i32
    return %arg0, %c0_i32, %c0_i32_0 : i32, i32, i32
  }
  func.func @transform_1(%arg0: i32, %arg1: i32) -> (i32, i32, i32) {
    %c0_i32 = arith.constant 0 : i32
    %c0_i32_0 = arith.constant 0 : i32
    %c0_i32_1 = arith.constant 0 : i32
    %c0_i32_2 = arith.constant 0 : i32
    return %c0_i32, %c0_i32_0, %c0_i32_1 : i32, i32, i32
  }
  func.func @transform_2(%arg0: i32, %arg1: i32) -> (i32, i32) {
    %c0_i32 = arith.constant 0 : i32
    %c0_i32_0 = arith.constant 0 : i32
    %c0_i32_1 = arith.constant 0 : i32
    return %c0_i32, %c0_i32_0 : i32, i32
  }
  func.func @transform_3(%arg0: i32, %arg1: i32) -> (i32, i32, i32) {
    %c0_i32 = arith.constant 0 : i32
    %c0_i32_0 = arith.constant 0 : i32
    return %arg0, %c0_i32, %arg1 : i32, i32, i32
  }
}

</mosaic_0001>

<llo_original>
// kernel: _lambda_.1
$region0: #{_lambda_.1}
  #allocation0 [shape = 'u32[]', space=smem, size = 0x4, offset = 0x4, fixed_abs, tag = 'smem constant byte address 0x4 - core index']
  #allocation1 [shape = 'u32[144,128]{1,0:T(1,128)}', space=vmem, size = 0x12000, scoped, tag = 'internal scratch']
  %s0 = inlined_call_operand.vmem [shape: f32[2,12,288], index: 0, kind: input, shape index: {}]
  %s1 = inlined_call_operand.vmem [shape: f32[3,20,12], index: 1, kind: input, shape index: {}]
  %s2 = inlined_call_operand.vmem [shape: f32[20,1], index: 2, kind: input, shape index: {}]
  %s3 = inlined_call_operand.vmem [shape: f32[2,20,256], index: 3, kind: output, shape index: {}]
  %s4 = sld [smem:[#allocation0]]
  $region79: #{_lambda_.1} parent=0
    _
  %s6 = ssub.s32 1, %s4
  %s7 = scalar_select 0, %s6, %s4
  $region1: #{_lambda_.1} parent=0
    #allocation2 [shape = 'u8[24576]{0}', space=vmem, size = 0x6000, scoped, tag = 'output window, operand 0']
    loop: start=0, step=1, limit=6
    $region2: #{_lambda_.1} parent=1 // loop_pre_header
      _
    $region3: #{_lambda_.1} parent=1 // loop_header
      %s9 = sphi 0, %s13
      %p10 = scmp.ge.s32.totalorder %s9, 6
      %s16 = sphi 0, %s28
      %s17 = sphi 0, %s24
      %s18 = sphi 0, %s16
      %s19 = sphi 0, %s17
      %s20 = sphi 0, %s18
      %s21 = sphi 0, %s19
      %s31 = sphi 0, %s33
      %s34 = sphi 0, %s31
      %s35 = sphi 0, %s34
      %s51 = sphi 0, %s35
      %s55 = sphi 0, %s55
      %s57 = sphi 0, %s55
      %s58 = sphi 0, %s57
      %s72 = sphi 0, %s58
      %s76 = sphi 0, %s76
      %s78 = sphi 0, %s76
      %s79 = sphi 0, %s78
      %s93 = sphi 0, %s79
      %s101 = sphi 0, %s103
      %s104 = sphi 0, %s101
      %s105 = sphi 0, %s104
      %s121 = sphi 0, %s105
    $region4: #{_lambda_.1} parent=1 // loop_header_branch
      %12 = sbr.rel (%p10) target = $region8
    $region5: #{_lambda_.1} parent=1 // loop_body
      %s14 = ssub.s32 %s9, 1
      %s15 = ssub.s32 %s9, 2
      %s22 = sadd.s32 1, %s17
      %p23 = scmp.ge.s32.totalorder %s22, 2
      %s24 = scalar_select %p23, 0, %s22
      %s25 = sadd.s32 1, %s16
      %s26 = scalar_select %p23, %s25, %s16
      %p27 = scmp.ge.s32.totalorder %s26, 2
      %s28 = scalar_select %p27, 0, %s26
      %s29 = ssub.s32 %s16, %s28
      %p30 = scmp.eq.s32.totalorder %s29, 0
      %s32 = sadd.s32 %s31, 1
      %s33 = scalar_select %p30, %s31, %s32
      %p36 = pneg %p30
      %p37 = scmp.eq.s32.totalorder %s9, 3
      %p38 = por %p36, %p37
      %p39 = scmp.ne.s32.totalorder %s31, %s34
      %p40 = scmp.eq.s32.totalorder %s9, 0
      %p41 = por %p39, %p40
      %p42 = scmp.ne.s32.totalorder %s31, %s34
      %p43 = scmp.eq.s32.totalorder %s14, 3
      %p44 = por %p42, %p43
      %p45 = scmp.ne.s32.totalorder %s34, %s35
      %p46 = scmp.eq.s32.totalorder %s14, 0
      %p47 = por %p45, %p46
      %p48 = scmp.ne.s32.totalorder %s34, %s35
      %p49 = scmp.eq.s32.totalorder %s15, 3
      %p50 = por %p48, %p49
      %p52 = scmp.ne.s32.totalorder %s35, %s51
      %p53 = scmp.eq.s32.totalorder %s15, 0
      %p54 = por %p52, %p53
      %s56 = sadd.s32 %s55, 1
      %p59 = scmp.eq.s32.totalorder %s9, 3
      %p60 = scmp.ne.s32.totalorder %s55, %s57
      %p61 = scmp.eq.s32.totalorder %s9, 0
      %p62 = por %p60, %p61
      %p63 = scmp.ne.s32.totalorder %s55, %s57
      %p64 = scmp.eq.s32.totalorder %s14, 3
      %p65 = por %p63, %p64
      %p66 = scmp.ne.s32.totalorder %s57, %s58
      %p67 = scmp.eq.s32.totalorder %s14, 0
      %p68 = por %p66, %p67
      %p69 = scmp.ne.s32.totalorder %s57, %s58
      %p70 = scmp.eq.s32.totalorder %s15, 3
      %p71 = por %p69, %p70
      %p73 = scmp.ne.s32.totalorder %s58, %s72
      %p74 = scmp.eq.s32.totalorder %s15, 0
      %p75 = por %p73, %p74
      %s77 = sadd.s32 %s76, 1
      %p80 = scmp.eq.s32.totalorder %s9, 3
      %p81 = scmp.ne.s32.totalorder %s76, %s78
      %p82 = scmp.eq.s32.totalorder %s9, 0
      %p83 = por %p81, %p82
      %p84 = scmp.ne.s32.totalorder %s76, %s78
      %p85 = scmp.eq.s32.totalorder %s14, 3
      %p86 = por %p84, %p85
      %p87 = scmp.ne.s32.totalorder %s78, %s79
      %p88 = scmp.eq.s32.totalorder %s14, 0
      %p89 = por %p87, %p88
      %p90 = scmp.ne.s32.totalorder %s78, %s79
      %p91 = scmp.eq.s32.totalorder %s15, 3
      %p92 = por %p90, %p91
      %p94 = scmp.ne.s32.totalorder %s79, %s93
      %p95 = scmp.eq.s32.totalorder %s15, 0
      %p96 = por %p94, %p95
      %s97 = ssub.s32 %s16, %s28
      %s98 = ssub.s32 %s17, %s24
      %s99 = sor.u32 %s97, %s98
      %p100 = scmp.eq.s32.totalorder %s99, 0
      %s102 = sadd.s32 %s101, 1
      %s103 = scalar_select %p100, %s101, %s102
      %p106 = pneg %p100
      %p107 = scmp.eq.s32.totalorder %s9, 3
      %p108 = por %p106, %p107
      %p109 = scmp.ne.s32.totalorder %s101, %s104
      %p110 = scmp.eq.s32.totalorder %s9, 0
      %p111 = por %p109, %p110
      %p112 = scmp.ne.s32.totalorder %s101, %s104
      %p113 = scmp.eq.s32.totalorder %s14, 3
      %p114 = por %p112, %p113
      %p115 = scmp.ne.s32.totalorder %s104, %s105
      %p116 = scmp.eq.s32.totalorder %s14, 0
      %p117 = por %p115, %p116
      %p118 = scmp.ne.s32.totalorder %s104, %s105
      %p119 = scmp.eq.s32.totalorder %s15, 3
      %p120 = por %p118, %p119
      %p122 = scmp.ne.s32.totalorder %s105, %s121
      %p123 = scmp.eq.s32.totalorder %s15, 0
      %p124 = por %p122, %p123
      %p125 = scmp.le.s32.totalorder 1, %s9
      %p126 = scmp.lt.s32.totalorder %s9, 5
      %p127 = pnand %p125, %p126
      %p128 = pneg %p127
      // Predicated region
      $region9: #{_lambda_.1} parent=5 // pred_check
        _
      $region10: #{_lambda_.1} parent=5 // pred_check_branch
        %130 = sbr.rel (%p127) target = $region12
      $region11: #{_lambda_.1} parent=5 // pred_region
        %s131 = ssub.s32 %s9, 1
        // Predicated region
        $region13: #{_lambda_.1} parent=11 // pred_check
          %p132 = pneg %p68
        $region14: #{_lambda_.1} parent=11 // pred_check_branch
          %134 = sbr.rel (%p132) target = $region16
        $region15: #{_lambda_.1} parent=11 // pred_region
          _
        $region16: #{_lambda_.1} parent=11 // pred_fallthru
          _
        // Predicated region
        $region17: #{_lambda_.1} parent=11 // pred_check
          %p135 = pneg %p89
        $region18: #{_lambda_.1} parent=11 // pred_check_branch
          %137 = sbr.rel (%p135) target = $region20
        $region19: #{_lambda_.1} parent=11 // pred_region
          _
        $region20: #{_lambda_.1} parent=11 // pred_fallthru
          _
      $region12: #{_lambda_.1} parent=5 // pred_fallthru
        _
      %p138 = scmp.lt.s32.totalorder %s9, 4
      // Predicated region
      $region21: #{_lambda_.1} parent=5 // pred_check
        %p139 = pneg %p138
      $region22: #{_lambda_.1} parent=5 // pred_check_branch
        %141 = sbr.rel (%p139) target = $region24
      $region23: #{_lambda_.1} parent=5 // pred_region
        // Predicated region
        $region25: #{_lambda_.1} parent=23 // pred_check
          %p142 = pneg %p41
        $region26: #{_lambda_.1} parent=23 // pred_check_branch
          %144 = sbr.rel (%p142) target = $region28
        $region27: #{_lambda_.1} parent=23 // pred_region
          %p145 = scmp.lt.s32.totalorder %s16, 1
          %s146 = scalar_select %p145, %s16, 1
          %s147 = smul.addr %s146, 6
          %s148 = smul.addr %s147, 8
          %s149 = scalar_lea.vmem %s0, %s148
        $region28: #{_lambda_.1} parent=23 // pred_fallthru
          _
      $region24: #{_lambda_.1} parent=5 // pred_fallthru
        _
      %p150 = scmp.le.s32.totalorder 1, %s9
      %p151 = scmp.lt.s32.totalorder %s9, 5
      %p152 = pnand %p150, %p151
      %p153 = pneg %p152
      // Predicated region
      $region29: #{_lambda_.1} parent=5 // pred_check
        _
      $region30: #{_lambda_.1} parent=5 // pred_check_branch
        %155 = sbr.rel (%p152) target = $region32
      $region31: #{_lambda_.1} parent=5 // pred_region
        %s156 = ssub.s32 %s9, 1
        %p157 = scmp.lt.s32.totalorder %s18, 1
        %s158 = scalar_select %p157, %s18, 1
        %s159 = smul.addr %s158, 6
        %s160 = smul.addr %s159, 8
        %s161 = scalar_lea.vmem %s0, %s160
        %p162 = pneg %p47
        %p163 = pneg %p44
        %p164 = pneg %p68
        %p165 = pneg %p65
        %p166 = pneg %p89
        %p167 = pneg %p86
        %p168 = pneg %p117
        %p169 = pneg %p114
        %s170 = sand.u32 %s104, 1
        %s171 = sand.u32 %s104, 1
        %s172 = smul.addr %s171, 24
        %s173 = scalar_lea.vmem [#allocation2], %s172
        %p174 = scmp.lt.s32.totalorder %s18, 1
        %s175 = scalar_select %p174, %s18, 1
        %s176 = smul.addr %s175, 6
        %s177 = smul.addr %s176, 8
        %s178 = scalar_lea.vmem %s0, %s177
        %s179 = smul.u32 %s19, 128
        %s180 = sshra.s32 %s179, 7
        %s181 = sand.u32 %s179, 127
        %s182 = smul.addr %s180, 8
        %s183 = scalar_lea.vmem %s178, %s182
        %v184 = vld [vmem:[%s183] sm:$0xff]
        %v185 = vld [vmem:[%s183 + $0x8] sm:$0xff]
        %v186 = vld [vmem:[%s183 + $0x18] sm:$0xf]
        %v187 = vld [vmem:[%s183 + $0x20] sm:$0xf]
        %v188 = vld [vmem:[%s1] sm:$0xff]
        %v189 = vld [vmem:[%s1 + $0x8] sm:$0xff]
        %v190 = vld [vmem:[%s1 + $0x10] sm:$0xf]
        %s191 = scalar_lea.vmem %s1, 24
        %v192 = vld [vmem:[%s191] sm:$0xff]
        %v193 = vld [vmem:[%s191 + $0x8] sm:$0xff]
        %v194 = vld [vmem:[%s191 + $0x10] sm:$0xf]
        %199 = vrot.lane.b32.xlu0 %v184, 112
        %v200 = vpop.permute.xlu0 %199
        %201 = vrot.lane.b32.xlu0 %v185, 112
        %v202 = vpop.permute.xlu0 %201
        %203 = vrot.lane.b32.xlu0 %v186, 112
        %v204 = vpop.permute.xlu0 %203
        %205 = vrot.lane.b32.xlu0 %v187, 112
        %v206 = vpop.permute.xlu0 %205
        %vm207 = vcmask 916480
        %v208 = vsel %vm207, %v200, %v202
        %v209 = vsel %vm207, %v204, %v206
        %vm211 = vcmask 97280
        %v213 = vsel %vm211, %v192, 0
        %v216 = vsel %vm211, %v193, 0
        %v219 = vsel %vm211, %v194, 0
        %vm221 = vcmask 1043456
        %v222 = vsel %vm221, %v209, 0
        %224 = vmatprep.subr.mxu0 0.0
        %225 = vmatpush1.msra.mxu0 0.0
        %226 = vmatprep.subr.mxu0 0.0
        %227 = vmatpush1.msra.mxu0 0.0
        %228 = vmatprep.subr.mxu0 0.0
        %229 = vmatpush1.msra.mxu0 0.0
        %230 = vmatprep.subr.mxu0 0.0
        %231 = vmatpush1.msra.mxu0 0.0
        %232 = vmatprep.subr.mxu0 0.0
        %233 = vmatpush1.msra.mxu0 0.0
        %234 = vmatprep.subr.mxu0 0.0
        %235 = vmatpush1.msra.mxu0 0.0
        %236 = vmatprep.subr.mxu0 0.0
        %237 = vmatpush1.msra.mxu0 0.0
        %238 = vmatprep.subr.mxu0 0.0
        %239 = vmatpush1.msra.mxu0 0.0
        %240 = vmatprep.subr.mxu0 0.0
        %241 = vmatpush1.msra.mxu0 0.0
        %242 = vmatprep.subr.mxu0 0.0
        %243 = vmatpush1.msra.mxu0 0.0
        %244 = vmatprep.subr.mxu0 0.0
        %245 = vmatpush1.msra.mxu0 0.0
        %246 = vmatprep.subr.mxu0 0.0
        %247 = vmatpush1.msra.mxu0 0.0
        %248 = vmatprep.subr.mxu0 0.0
        %249 = vmatpush1.msra.mxu0 0.0
        %250 = vmatprep.subr.mxu0 0.0
        %251 = vmatpush1.msra.mxu0 0.0
        %252 = vmatprep.subr.mxu0 0.0
        %253 = vmatpush1.msra.mxu0 %v222
        %254 = vmatprep.subr.mxu0 0.0
        %255 = vmatpush1.msra.mxu0 %v208
        %256 = vmatprep.subr.mxu0 0.0
        %257 = vmatpush2.msra.mxu0 0.0
        %258 = vmatprep.subr.mxu0 0.0
        %259 = vmatpush2.msra.mxu0 0.0
        %260 = vmatprep.subr.mxu0 0.0
        %261 = vmatpush2.msra.mxu0 0.0
        %262 = vmatprep.subr.mxu0 0.0
        %263 = vmatpush2.msra.mxu0 0.0
        %264 = vmatprep.subr.mxu0 0.0
        %265 = vmatpush2.msra.mxu0 0.0
        %266 = vmatprep.subr.mxu0 0.0
        %267 = vmatpush2.msra.mxu0 0.0
        %268 = vmatprep.subr.mxu0 0.0
        %269 = vmatpush2.msra.mxu0 0.0
        %270 = vmatprep.subr.mxu0 0.0
        %271 = vmatpush2.msra.mxu0 0.0
        %272 = vmatprep.subr.mxu0 0.0
        %273 = vmatpush2.msra.mxu0 0.0
        %274 = vmatprep.subr.mxu0 0.0
        %275 = vmatpush2.msra.mxu0 0.0
        %276 = vmatprep.subr.mxu0 0.0
        %277 = vmatpush2.msra.mxu0 0.0
        %278 = vmatprep.subr.mxu0 0.0
        %279 = vmatpush2.msra.mxu0 0.0
        %280 = vmatprep.subr.mxu0 0.0
        %281 = vmatpush2.msra.mxu0 0.0
        %282 = vmatprep.subr.mxu0 0.0
        %283 = vmatpush2.msra.mxu0 0.0
        %284 = vmatprep.subr.mxu0 0.0
        %285 = vmatpush2.msra.mxu0 0.0
        %286 = vmatprep.subr.mxu0 0.0
        %287 = vmatpush2.msra.mxu0 0.0
        %288 = vmatprep.mubr.f32.mxu0 0.0
        %289 = vmatmul.mubr.f32.gmra.mxu0 %v213
        %v290 = vpop.f32.mrf.mxu0
        %v291 = vadd.f32 0.0, %v290
        %v292 = vpop.f32.mrf.mxu0
        %293 = vmatprep.mubr.f32.mxu0 0.0
        %294 = vmatmul.mubr.f32.gmra.mxu0 %v216
        %v295 = vpop.f32.mrf.mxu0
        %v296 = vadd.f32 0.0, %v295
        %v297 = vpop.f32.mrf.mxu0
        %298 = vmatprep.mubr.f32.mxu0 0.0
        %299 = vmatmul.mubr.f32.gmra.mxu0 %v219
        %v300 = vpop.f32.mrf.mxu0
        %v301 = vadd.f32 0.0, %v300
        %v302 = vpop.f32.mrf.mxu0
        %303 = vdwg.mxu0
        %v305 = vsel %vm211, %v188, 0
        %v308 = vsel %vm211, %v189, 0
        %v311 = vsel %vm211, %v190, 0
        %v313 = vsel %vm221, %v186, 0
        %315 = vmatprep.subr.mxu0 0.0
        %316 = vmatpush1.msra.mxu0 0.0
        %317 = vmatprep.subr.mxu0 0.0
        %318 = vmatpush1.msra.mxu0 0.0
        %319 = vmatprep.subr.mxu0 0.0
        %320 = vmatpush1.msra.mxu0 0.0
        %321 = vmatprep.subr.mxu0 0.0
        %322 = vmatpush1.msra.mxu0 0.0
        %323 = vmatprep.subr.mxu0 0.0
        %324 = vmatpush1.msra.mxu0 0.0
        %325 = vmatprep.subr.mxu0 0.0
        %326 = vmatpush1.msra.mxu0 0.0
        %327 = vmatprep.subr.mxu0 0.0
        %328 = vmatpush1.msra.mxu0 0.0
        %329 = vmatprep.subr.mxu0 0.0
        %330 = vmatpush1.msra.mxu0 0.0
        %331 = vmatprep.subr.mxu0 0.0
        %332 = vmatpush1.msra.mxu0 0.0
        %333 = vmatprep.subr.mxu0 0.0
        %334 = vmatpush1.msra.mxu0 0.0
        %335 = vmatprep.subr.mxu0 0.0
        %336 = vmatpush1.msra.mxu0 0.0
        %337 = vmatprep.subr.mxu0 0.0
        %338 = vmatpush1.msra.mxu0 0.0
        %339 = vmatprep.subr.mxu0 0.0
        %340 = vmatpush1.msra.mxu0 0.0
        %341 = vmatprep.subr.mxu0 0.0
        %342 = vmatpush1.msra.mxu0 0.0
        %343 = vmatprep.subr.mxu0 0.0
        %344 = vmatpush1.msra.mxu0 %v313
        %345 = vmatprep.subr.mxu0 0.0
        %346 = vmatpush1.msra.mxu0 %v184
        %347 = vmatprep.subr.mxu0 0.0
        %348 = vmatpush2.msra.mxu0 0.0
        %349 = vmatprep.subr.mxu0 0.0
        %350 = vmatpush2.msra.mxu0 0.0
        %351 = vmatprep.subr.mxu0 0.0
        %352 = vmatpush2.msra.mxu0 0.0
        %353 = vmatprep.subr.mxu0 0.0
        %354 = vmatpush2.msra.mxu0 0.0
        %355 = vmatprep.subr.mxu0 0.0
        %356 = vmatpush2.msra.mxu0 0.0
        %357 = vmatprep.subr.mxu0 0.0
        %358 = vmatpush2.msra.mxu0 0.0
        %359 = vmatprep.subr.mxu0 0.0
        %360 = vmatpush2.msra.mxu0 0.0
        %361 = vmatprep.subr.mxu0 0.0
        %362 = vmatpush2.msra.mxu0 0.0
        %363 = vmatprep.subr.mxu0 0.0
        %364 = vmatpush2.msra.mxu0 0.0
        %365 = vmatprep.subr.mxu0 0.0
        %366 = vmatpush2.msra.mxu0 0.0
        %367 = vmatprep.subr.mxu0 0.0
        %368 = vmatpush2.msra.mxu0 0.0
        %369 = vmatprep.subr.mxu0 0.0
        %370 = vmatpush2.msra.mxu0 0.0
        %371 = vmatprep.subr.mxu0 0.0
        %372 = vmatpush2.msra.mxu0 0.0
        %373 = vmatprep.subr.mxu0 0.0
        %374 = vmatpush2.msra.mxu0 0.0
        %375 = vmatprep.subr.mxu0 0.0
        %376 = vmatpush2.msra.mxu0 0.0
        %377 = vmatprep.subr.mxu0 0.0
        %378 = vmatpush2.msra.mxu0 0.0
        %379 = vmatprep.mubr.f32.mxu0 0.0
        %380 = vmatmul.mubr.f32.gmra.mxu0 %v305
        %v381 = vpop.f32.mrf.mxu0
        %v382 = vadd.f32 %v291, %v381
        %v383 = vpop.f32.mrf.mxu0
        %384 = vmatprep.mubr.f32.mxu0 0.0
        %385 = vmatmul.mubr.f32.gmra.mxu0 %v308
        %v386 = vpop.f32.mrf.mxu0
        %v387 = vadd.f32 %v296, %v386
        %v388 = vpop.f32.mrf.mxu0
        %389 = vmatprep.mubr.f32.mxu0 0.0
        %390 = vmatmul.mubr.f32.gmra.mxu0 %v311
        %v391 = vpop.f32.mrf.mxu0
        %v392 = vadd.f32 %v301, %v391
        %v393 = vpop.f32.mrf.mxu0
        %394 = vdwg.mxu0
        %s395 = scalar_lea.vmem %s1, 48
        %v396 = vld [vmem:[%s395] sm:$0xff]
        %v397 = vld [vmem:[%s395 + $0x8] sm:$0xff]
        %v398 = vld [vmem:[%s395 + $0x10] sm:$0xf]
        %399 = vrot.lane.b32.xlu0 %v184, 96
        %v400 = vpop.permute.xlu0 %399
        %401 = vrot.lane.b32.xlu0 %v185, 96
        %v402 = vpop.permute.xlu0 %401
        %403 = vrot.lane.b32.xlu0 %v186, 96
        %v404 = vpop.permute.xlu0 %403
        %405 = vrot.lane.b32.xlu0 %v187, 96
        %v406 = vpop.permute.xlu0 %405
        %vm407 = vcmask 785408
        %v408 = vsel %vm407, %v400, %v402
        %v409 = vsel %vm407, %v404, %v406
        %v412 = vsel %vm211, %v396, 0
        %v415 = vsel %vm211, %v397, 0
        %v418 = vsel %vm211, %v398, 0
        %v420 = vsel %vm221, %v409, 0
        %422 = vmatprep.subr.mxu0 0.0
        %423 = vmatpush1.msra.mxu0 0.0
        %424 = vmatprep.subr.mxu0 0.0
        %425 = vmatpush1.msra.mxu0 0.0
        %426 = vmatprep.subr.mxu0 0.0
        %427 = vmatpush1.msra.mxu0 0.0
        %428 = vmatprep.subr.mxu0 0.0
        %429 = vmatpush1.msra.mxu0 0.0
        %430 = vmatprep.subr.mxu0 0.0
        %431 = vmatpush1.msra.mxu0 0.0
        %432 = vmatprep.subr.mxu0 0.0
        %433 = vmatpush1.msra.mxu0 0.0
        %434 = vmatprep.subr.mxu0 0.0
        %435 = vmatpush1.msra.mxu0 0.0
        %436 = vmatprep.subr.mxu0 0.0
        %437 = vmatpush1.msra.mxu0 0.0
        %438 = vmatprep.subr.mxu0 0.0
        %439 = vmatpush1.msra.mxu0 0.0
        %440 = vmatprep.subr.mxu0 0.0
        %441 = vmatpush1.msra.mxu0 0.0
        %442 = vmatprep.subr.mxu0 0.0
        %443 = vmatpush1.msra.mxu0 0.0
        %444 = vmatprep.subr.mxu0 0.0
        %445 = vmatpush1.msra.mxu0 0.0
        %446 = vmatprep.subr.mxu0 0.0
        %447 = vmatpush1.msra.mxu0 0.0
        %448 = vmatprep.subr.mxu0 0.0
        %449 = vmatpush1.msra.mxu0 0.0
        %450 = vmatprep.subr.mxu0 0.0
        %451 = vmatpush1.msra.mxu0 %v420
        %452 = vmatprep.subr.mxu0 0.0
        %453 = vmatpush1.msra.mxu0 %v408
        %454 = vmatprep.subr.mxu0 0.0
        %455 = vmatpush2.msra.mxu0 0.0
        %456 = vmatprep.subr.mxu0 0.0
        %457 = vmatpush2.msra.mxu0 0.0
        %458 = vmatprep.subr.mxu0 0.0
        %459 = vmatpush2.msra.mxu0 0.0
        %460 = vmatprep.subr.mxu0 0.0
        %461 = vmatpush2.msra.mxu0 0.0
        %462 = vmatprep.subr.mxu0 0.0
        %463 = vmatpush2.msra.mxu0 0.0
        %464 = vmatprep.subr.mxu0 0.0
        %465 = vmatpush2.msra.mxu0 0.0
        %466 = vmatprep.subr.mxu0 0.0
        %467 = vmatpush2.msra.mxu0 0.0
        %468 = vmatprep.subr.mxu0 0.0
        %469 = vmatpush2.msra.mxu0 0.0
        %470 = vmatprep.subr.mxu0 0.0
        %471 = vmatpush2.msra.mxu0 0.0
        %472 = vmatprep.subr.mxu0 0.0
        %473 = vmatpush2.msra.mxu0 0.0
        %474 = vmatprep.subr.mxu0 0.0
        %475 = vmatpush2.msra.mxu0 0.0
        %476 = vmatprep.subr.mxu0 0.0
        %477 = vmatpush2.msra.mxu0 0.0
        %478 = vmatprep.subr.mxu0 0.0
        %479 = vmatpush2.msra.mxu0 0.0
        %480 = vmatprep.subr.mxu0 0.0
        %481 = vmatpush2.msra.mxu0 0.0
        %482 = vmatprep.subr.mxu0 0.0
        %483 = vmatpush2.msra.mxu0 0.0
        %484 = vmatprep.subr.mxu0 0.0
        %485 = vmatpush2.msra.mxu0 0.0
        %486 = vmatprep.mubr.f32.mxu0 0.0
        %487 = vmatmul.mubr.f32.gmra.mxu0 %v412
        %v488 = vpop.f32.mrf.mxu0
        %v489 = vadd.f32 0.0, %v488
        %v490 = vpop.f32.mrf.mxu0
        %491 = vmatprep.mubr.f32.mxu0 0.0
        %492 = vmatmul.mubr.f32.gmra.mxu0 %v415
        %v493 = vpop.f32.mrf.mxu0
        %v494 = vadd.f32 0.0, %v493
        %v495 = vpop.f32.mrf.mxu0
        %496 = vmatprep.mubr.f32.mxu0 0.0
        %497 = vmatmul.mubr.f32.gmra.mxu0 %v418
        %v498 = vpop.f32.mrf.mxu0
        %v499 = vadd.f32 0.0, %v498
        %v500 = vpop.f32.mrf.mxu0
        %501 = vdwg.mxu0
        %v502 = vadd.f32 %v382, %v489
        %v503 = vadd.f32 %v387, %v494
        %v504 = vadd.f32 %v392, %v499
        %v505 = vld [vmem:[%s2] sm:$0xff]
        %v506 = vld [vmem:[%s2 + $0x8] sm:$0xff]
        %v507 = vld [vmem:[%s2 + $0x10] sm:$0xf]
        %509 = vset.pattern.permute.xlu0 0
        %510 = vperm.xlu0 %509, %v505
        %v511 = vpop.permute.xlu0 %510
        %514 = vset.pattern.permute.xlu0 0
        %515 = vperm.xlu0 %514, %v506
        %v516 = vpop.permute.xlu0 %515
        %519 = vset.pattern.permute.xlu0 0
        %520 = vperm.xlu0 %519, %v507
        %v521 = vpop.permute.xlu0 %520
        %v523 = vadd.f32 %v502, %v511
        %v524 = vadd.f32 %v503, %v516
        %v525 = vadd.f32 %v504, %v521
        %v526 = vmax.f32 %v523, 0.0
        %v527 = vmax.f32 %v524, 0.0
        %v528 = vmax.f32 %v525, 0.0
        %529 = vst [vmem:[%s173] sm:$0xff] %v526
        %530 = vst [vmem:[%s173 + $0x8] sm:$0xff] %v527
        %531 = vst [vmem:[%s173 + $0x10] sm:$0xf] %v528
        %s532 = sand.u32 %s104, 1
        %s533 = sand.u32 %s104, 1
        %s534 = smul.addr %s533, 24
        %s535 = scalar_lea.vmem [#allocation2], %s534
        // Predicated region
        $region33: #{_lambda_.1} parent=31 // pred_check
          %p536 = pneg %p114
        $region34: #{_lambda_.1} parent=31 // pred_check_branch
          %538 = sbr.rel (%p536) target = $region36
        $region35: #{_lambda_.1} parent=31 // pred_region
          %s539 = smul.addr %s18, 6
          %s540 = sadd.s32 %s19, %s539
          %s541 = smul.addr %s540, 8
          %s542 = scalar_lea.vmem %s3, %s541
          // Predicated region
          $region37: #{_lambda_.1} parent=35 // pred_check
            _
          $region38: #{_lambda_.1} parent=35 // pred_check_branch
            %544 = sbr.rel (0) target = $region40
          $region39: #{_lambda_.1} parent=35 // pred_region
            // Predicated region
            $region41: #{_lambda_.1} parent=39 // pred_check
              _
            $region42: #{_lambda_.1} parent=39 // pred_check_branch
              %546 = sbr.rel (0) target = $region44
            $region43: #{_lambda_.1} parent=39 // pred_region
              // Predicated region
              $region56: #{_lambda_.1} parent=43 // pred_check
                _
              $region57: #{_lambda_.1} parent=43 // pred_check_branch
                %566 = sbr.rel (0) target = $region59
              $region58: #{_lambda_.1} parent=43 // pred_region
                loop: start=0, step=1, limit=1
                $region60: #{_lambda_.1} parent=58 // loop_pre_header
                  _
                $region61: #{_lambda_.1} parent=58 // loop_header
                  %s568 = sphi 0, %s572
                  %p569 = scmp.ge.s32.totalorder %s568, 1
                  %s573 = sphi %s535, %s535
                  %s574 = sphi %s542, %s542
                $region62: #{_lambda_.1} parent=58 // loop_header_branch
                  %571 = sbr.rel (%p569) target = $region66
                $region63: #{_lambda_.1} parent=58 // loop_body
                  %v575 = vld [vmem:[%s573] sm:$0xff]
                  %576 = vst [vmem:[%s574] sm:$0xff] %v575
                  %v577 = vld [vmem:[%s573 + $0x8] sm:$0xff]
                  %578 = vst [vmem:[%s574 + $0x10] sm:$0xff] %v577
                  %v579 = vld [vmem:[%s573 + $0x10] sm:$0xff]
                  %580 = vst [vmem:[%s574 + $0x20] sm:$0xff] %v579
                $region64: #{_lambda_.1} parent=58 // loop_footer
                  %s572 = sadd.s32 1, %s568
                $region65: #{_lambda_.1} parent=58 // loop_footer_branch
                  %567 = sbr.rel target = $region61
                $region66: #{_lambda_.1} parent=58 // loop_exit
                  _
              $region59: #{_lambda_.1} parent=43 // pred_fallthru
                _
              // Predicated region
              $region67: #{_lambda_.1} parent=43 // pred_check
                _
              $region68: #{_lambda_.1} parent=43 // pred_check_branch
                %582 = sbr.rel target = $region70
              $region69: #{_lambda_.1} parent=43 // pred_region
                _
              $region70: #{_lambda_.1} parent=43 // pred_fallthru
                _
            $region44: #{_lambda_.1} parent=39 // pred_fallthru
              _
            // Predicated region
            $region45: #{_lambda_.1} parent=39 // pred_check
              _
            $region46: #{_lambda_.1} parent=39 // pred_check_branch
              %548 = sbr.rel target = $region48
            $region47: #{_lambda_.1} parent=39 // pred_region
              %s550 = ssub.s32 256, 1
              loop: start=0, step=1, limit=1
              $region49: #{_lambda_.1} parent=47 // loop_pre_header
                _
              $region50: #{_lambda_.1} parent=47 // loop_header
                %s552 = sphi 0, %s556
                %p553 = scmp.ge.s32.totalorder %s552, 1
                %s557 = sphi %s535, %s535
                %s558 = sphi %s542, %s542
              $region51: #{_lambda_.1} parent=47 // loop_header_branch
                %555 = sbr.rel (%p553) target = $region55
              $region52: #{_lambda_.1} parent=47 // loop_body
                %v559 = vld [vmem:[%s557] sm:%s550]
                %560 = vst [vmem:[%s558] sm:%s550] %v559
                %v561 = vld [vmem:[%s557 + $0x8] sm:%s550]
                %562 = vst [vmem:[%s558 + $0x10] sm:%s550] %v561
                %v563 = vld [vmem:[%s557 + $0x10] sm:%s550]
                %564 = vst [vmem:[%s558 + $0x20] sm:%s550] %v563
              $region53: #{_lambda_.1} parent=47 // loop_footer
                %s556 = sadd.s32 1, %s552
              $region54: #{_lambda_.1} parent=47 // loop_footer_branch
                %551 = sbr.rel target = $region50
              $region55: #{_lambda_.1} parent=47 // loop_exit
                _
            $region48: #{_lambda_.1} parent=39 // pred_fallthru
              _
          $region40: #{_lambda_.1} parent=35 // pred_fallthru
            _
          %583 = vnop
        $region36: #{_lambda_.1} parent=31 // pred_fallthru
          _
      $region32: #{_lambda_.1} parent=5 // pred_fallthru
        _
      %p584 = scmp.le.s32.totalorder 2, %s9
      // Predicated region
      $region71: #{_lambda_.1} parent=5 // pred_check
        %p585 = pneg %p584
      $region72: #{_lambda_.1} parent=5 // pred_check_branch
        %587 = sbr.rel (%p585) target = $region74
      $region73: #{_lambda_.1} parent=5 // pred_region
        %s588 = ssub.s32 %s9, 2
        // Predicated region
        $region75: #{_lambda_.1} parent=73 // pred_check
          %p589 = pneg %p120
        $region76: #{_lambda_.1} parent=73 // pred_check_branch
          %591 = sbr.rel (%p589) target = $region78
        $region77: #{_lambda_.1} parent=73 // pred_region
          %s592 = sand.u32 %s105, 1
          %s593 = sand.u32 %s105, 1
          %s594 = smul.addr %s593, 24
          %s595 = scalar_lea.vmem [#allocation2], %s594
        $region78: #{_lambda_.1} parent=73 // pred_fallthru
          _
      $region74: #{_lambda_.1} parent=5 // pred_fallthru
        _
    $region6: #{_lambda_.1} parent=1 // loop_footer
      %s13 = sadd.s32 1, %s9
    $region7: #{_lambda_.1} parent=1 // loop_footer_branch
      %8 = sbr.rel target = $region3
    $region8: #{_lambda_.1} parent=1 // loop_exit
      _

</llo_original>
